<compile_context>
chip_gen: v5e
topology: v5e:2x2
jax: 0.10.0
libtpu: 0.0.40
codegen_flags: <defaults>
</compile_context>

<pallas_src>
import jax
import jax.numpy as jnp
from jax import lax
from jax.experimental import pallas as pl
from jax.experimental.pallas import tpu as pltpu

EPS = 1e-5


# ---------------------------------------------------------------------------
# Fused kernel: works on lane-dense (N*H, W*C) 2-D views, fully VMEM-resident.
# ---------------------------------------------------------------------------
def residual_block_kernel(x_ref, shift_ref, w1d_ref, w2_ref,
                          fold_ref, spread_ref, bn_ref, out_ref):
    """out = relu( BN2(conv2(relu(BN1(conv1(x))))) + BNd(conv1x1(x)) )

    x_ref      : (R, W*Cin)              lane-dense input view, R = N*H
    shift_ref  : (R, 2R)                 packed 0/1 [row r<-r-1 | row r<-r+1]
                                          (zero rows at image boundaries = pad)
    w1d_ref    : (W*Cin, 4*W*Cout)       [conv1 tap -1 | tap 0 | tap +1 | 1x1 down]
    w2_ref     : (W*Cout, 3*W*Cout)      [conv2 tap -1 | tap 0 | tap +1]
    fold_ref   : (W*Cout, Cout)          0/1: dense column -> channel reduction
    spread_ref : (Cout, W*Cout)          0/1: channel -> dense column broadcast
    bn_ref     : (6, Cout)               rows: g1, b1, g2, b2, gd, bd
    out_ref    : (R, W*Cout)             lane-dense output view
    """
    f32 = jnp.float32
    rows = x_ref.shape[0]                     # N*H
    wcout = out_ref.shape[1]                  # W*Cout  (lane-dense width)
    cout = fold_ref.shape[1]
    w = wcout // cout
    inv_m = 1.0 / float(rows * w)             # 1 / (N*H*W)

    x = x_ref[...]
    row_shift = shift_ref[...]                # (R, 2R)
    fold = fold_ref[...]
    spread = spread_ref[...]

    def vertical_taps(y0, y1, y2):
        # acc = S_prev @ y0 + y1 + S_next @ y2, fused into ONE MXU matmul by
        # stacking [y0; y2] along rows against the packed row-select matrix.
        stacked = jnp.concatenate([y0, y2], axis=0)          # (2R, W*Cout)
        return y1 + jnp.dot(row_shift, stacked, preferred_element_type=f32)

    def bn_train(acc, gamma, beta):
        # Training-mode BN (biased variance), single pass: var = E[x^2]-mean^2,
        # folded into per-channel scale/shift applied on the lane-dense view.
        col_sum = jnp.sum(acc, axis=0, keepdims=True)         # (1, W*Cout)
        col_sq = jnp.sum(acc * acc, axis=0, keepdims=True)    # (1, W*Cout)
        ch_mean = jnp.dot(col_sum, fold, preferred_element_type=f32) * inv_m
        ch_msq = jnp.dot(col_sq, fold, preferred_element_type=f32) * inv_m
        ch_var = ch_msq - ch_mean * ch_mean                   # (1, Cout)
        scale = gamma * lax.rsqrt(ch_var + EPS)               # (1, Cout)
        bias = beta - ch_mean * scale
        scale_d = jnp.dot(scale, spread, preferred_element_type=f32)
        bias_d = jnp.dot(bias, spread, preferred_element_type=f32)
        return acc * scale_d + bias_d                          # lane-dense

    # conv1 (3 vertical taps, banded) + 1x1 downsample: ONE wide MXU matmul.
    y = jnp.dot(x, w1d_ref[...], preferred_element_type=f32)   # (R, 4*W*Cout)
    acc1 = vertical_taps(y[:, 0:wcout],
                         y[:, wcout:2 * wcout],
                         y[:, 2 * wcout:3 * wcout])
    idn_pre = y[:, 3 * wcout:4 * wcout]                        # 1x1 conv output

    h1 = jnp.maximum(bn_train(acc1, bn_ref[0:1, :], bn_ref[1:2, :]), 0.0)

    # conv2: ONE wide MXU matmul, then the packed vertical-tap combine.
    y2 = jnp.dot(h1, w2_ref[...], preferred_element_type=f32)  # (R, 3*W*Cout)
    acc2 = vertical_taps(y2[:, 0:wcout],
                         y2[:, wcout:2 * wcout],
                         y2[:, 2 * wcout:3 * wcout])

    o2 = bn_train(acc2, bn_ref[2:3, :], bn_ref[3:4, :])
    idn = bn_train(idn_pre, bn_ref[4:5, :], bn_ref[5:6, :])
    out_ref[...] = jnp.maximum(o2 + idn, 0.0)


# ---------------------------------------------------------------------------
# Host-side (tiny, one-time) weight / index-matrix transforms.
# ---------------------------------------------------------------------------
def _banded_conv3x3_weights(w_hwio, W):
    """(3,3,Ci,Co) HWIO -> (3, W*Ci, W*Co) with
    b[ky, wi*Ci+c, wo*Co+o] = w[ky, wi-wo+1, c, o] for |wi-wo|<=1, else 0
    (the zero band encodes padding=1 along the width axis)."""
    KH, KW, Ci, Co = w_hwio.shape
    wi = jnp.arange(W)[:, None]
    wo = jnp.arange(W)[None, :]
    kx = wi - wo + KW // 2                                   # (W, W)
    valid = (kx >= 0) & (kx < KW)
    g = w_hwio[:, jnp.clip(kx, 0, KW - 1)]                   # (KH, W, W, Ci, Co)
    g = jnp.where(valid[None, :, :, None, None], g, 0.0)
    return jnp.transpose(g, (0, 1, 3, 2, 4)).reshape(KH, W * Ci, W * Co)


def _block_diag_1x1_weights(wd, W):
    """(Ci,Co) -> (W*Ci, W*Co) block-diagonal (1x1 conv in the dense view)."""
    eye = jnp.eye(W, dtype=wd.dtype)
    Ci, Co = wd.shape
    return jnp.einsum("ab,co->acbo", eye, wd).reshape(W * Ci, W * Co)


def _row_shift_matrix(N, H):
    """Packed 0/1 (N*H, 2*N*H) matrix: [select row y-1 | select row y+1] within
    each image (zero rows at image boundaries implement padding=1 along H)."""
    r = jnp.arange(N * H)
    y = r % H
    prev = (r[:, None] - 1 == r[None, :]) & (y[:, None] > 0)
    nxt = (r[:, None] + 1 == r[None, :]) & (y[:, None] < H - 1)
    return jnp.concatenate([prev, nxt], axis=1).astype(jnp.float32)


def _fold_spread(W, Co):
    """0/1 matrices mapping dense columns (j = w*Co + o) <-> channels o."""
    j = jnp.arange(W * Co)
    o = jnp.arange(Co)
    fold = (j[:, None] % Co == o[None, :]).astype(jnp.float32)   # (W*Co, Co)
    return fold, fold.T


def residual_block(x_nchw, params):
    """Wrapper: NCHW in / NCHW out; kernel runs on lane-dense NHWC views."""
    x = jnp.transpose(x_nchw, (0, 2, 3, 1)).astype(jnp.float32)   # NHWC
    N, H, W, Cin = x.shape
    Cout = params["w1"].shape[-1]
    R = N * H

    x2d = x.reshape(R, W * Cin)                      # layout-free lane-dense view
    wb1 = _banded_conv3x3_weights(params["w1"], W)   # (3, W*Cin,  W*Cout)
    wb2 = _banded_conv3x3_weights(params["w2"], W)   # (3, W*Cout, W*Cout)
    wbd = _block_diag_1x1_weights(params["wd"], W)   # (W*Cin, W*Cout)
    # conv1's three vertical-tap bands + the 1x1 downsample -> one wide weight.
    w1d = jnp.concatenate([wb1[0], wb1[1], wb1[2], wbd], axis=1)  # (W*Cin, 4*W*Cout)
    w2c = jnp.concatenate([wb2[0], wb2[1], wb2[2]], axis=1)       # (W*Cout, 3*W*Cout)
    row_shift = _row_shift_matrix(N, H)                           # (R, 2R)
    fold, spread = _fold_spread(W, Cout)
    bnp = jnp.stack([params["g1"], params["b1"],
                     params["g2"], params["b2"],
                     params["gd"], params["bd"]], axis=0)         # (6, Cout)

    vmem = pl.BlockSpec(memory_space=pltpu.MemorySpace.VMEM)
    out2d = pl.pallas_call(
        residual_block_kernel,
        out_shape=jax.ShapeDtypeStruct((R, W * Cout), jnp.float32),
        in_specs=[vmem] * 7,
        out_specs=vmem,
        compiler_params=pltpu.CompilerParams(
            vmem_limit_bytes=32 * 1024 * 1024),
    )(x2d, row_shift, w1d, w2c, fold, spread, bnp)
    out = out2d.reshape(N, H, W, Cout)               # layout-free un-flatten
    return jnp.transpose(out, (0, 3, 1, 2))          # back to NCHW


# ---------------------------------------------------------------------------
# Pure-JAX reference (same math, via lax.conv) for correctness checking.
# ---------------------------------------------------------------------------
def _bn_train(x_nhwc, gamma, beta):
    mean = jnp.mean(x_nhwc, axis=(0, 1, 2), keepdims=True)
    var = jnp.mean((x_nhwc - mean) ** 2, axis=(0, 1, 2), keepdims=True)
    return (x_nhwc - mean) * lax.rsqrt(var + EPS) * gamma + beta


def residual_block_ref(x_nchw, params):
    x = jnp.transpose(x_nchw, (0, 2, 3, 1)).astype(jnp.float32)
    dn = ("NHWC", "HWIO", "NHWC")
    conv = lambda a, w: lax.conv_general_dilated(a, w, (1, 1), "SAME",
                                                 dimension_numbers=dn)
    out = jnp.maximum(_bn_train(conv(x, params["w1"]), params["g1"], params["b1"]), 0.0)
    out = _bn_train(conv(out, params["w2"]), params["g2"], params["b2"])
    wd_hwio = params["wd"].reshape(1, 1, *params["wd"].shape)
    identity = _bn_train(conv(x, wd_hwio), params["gd"], params["bd"])
    out = jnp.maximum(out + identity, 0.0)
    return jnp.transpose(out, (0, 3, 1, 2))


if __name__ == "__main__":
    # ResidualBlock(in_channels=4, out_channels=8, stride=1) -> downsample = 1x1 conv + BN
    N, Cin, Cout, H, W = 2, 4, 8, 16, 16

    key = jax.random.PRNGKey(0)
    ks = jax.random.split(key, 11)

    # Deterministic synthetic parameters (PyTorch OIHW conv weights -> HWIO).
    w1_oihw = jax.random.normal(ks[0], (Cout, Cin, 3, 3), jnp.float32) * 0.1
    w2_oihw = jax.random.normal(ks[1], (Cout, Cout, 3, 3), jnp.float32) * 0.1
    wd_oihw = jax.random.normal(ks[2], (Cout, Cin, 1, 1), jnp.float32) * 0.1
    params = {
        "w1": jnp.transpose(w1_oihw, (2, 3, 1, 0)),                     # (3,3,Cin,Cout)
        "w2": jnp.transpose(w2_oihw, (2, 3, 1, 0)),                     # (3,3,Cout,Cout)
        "wd": jnp.transpose(wd_oihw, (2, 3, 1, 0)).reshape(Cin, Cout),  # (Cin,Cout)
        "g1": jax.random.uniform(ks[3], (Cout,), jnp.float32, 0.5, 1.5),
        "b1": jax.random.normal(ks[4], (Cout,), jnp.float32) * 0.1,
        "g2": jax.random.uniform(ks[5], (Cout,), jnp.float32, 0.5, 1.5),
        "b2": jax.random.normal(ks[6], (Cout,), jnp.float32) * 0.1,
        "gd": jax.random.uniform(ks[7], (Cout,), jnp.float32, 0.5, 1.5),
        "bd": jax.random.normal(ks[8], (Cout,), jnp.float32) * 0.1,
    }

    x = jax.random.normal(ks[9], (N, Cin, H, W), jnp.float32)            # NCHW input

    out = jax.block_until_ready(residual_block(x, params))
    ref = jax.block_until_ready(residual_block_ref(x, params))

    assert out.shape == (N, Cout, H, W), out.shape
    assert jnp.allclose(out, ref, atol=1e-4, rtol=1e-4), \
        float(jnp.max(jnp.abs(out - ref)))

    print("KERNEL_OK")
</pallas_src>

<mosaic_0001>
module attributes {stable_mosaic.version = 11 : i64} {
  func.func @residual_block_kernel(%arg0: memref<32x64xf32, #tpu.memory_space<vmem>>, %arg1: memref<32x64xf32, #tpu.memory_space<vmem>>, %arg2: memref<64x512xf32, #tpu.memory_space<vmem>>, %arg3: memref<128x384xf32, #tpu.memory_space<vmem>>, %arg4: memref<128x8xf32, #tpu.memory_space<vmem>>, %arg5: memref<8x128xf32, #tpu.memory_space<vmem>>, %arg6: memref<6x8xf32, #tpu.memory_space<vmem>>, %arg7: memref<32x128xf32, #tpu.memory_space<vmem>>) attributes {dimension_semantics = [], scalar_prefetch = 0 : i64, scratch_operands = 0 : i64, tpu.core_type = #tpu.core_type<tc>} {
    %c0 = arith.constant 0 : index
    %c0_0 = arith.constant 0 : index
    %0 = vector.load %arg0[%c0, %c0_0] : memref<32x64xf32, #tpu.memory_space<vmem>>, vector<32x64xf32>
    %c0_1 = arith.constant 0 : index
    %c0_2 = arith.constant 0 : index
    %1 = vector.load %arg1[%c0_1, %c0_2] : memref<32x64xf32, #tpu.memory_space<vmem>>, vector<32x64xf32>
    %c0_3 = arith.constant 0 : index
    %c0_4 = arith.constant 0 : index
    %2 = vector.load %arg4[%c0_3, %c0_4] : memref<128x8xf32, #tpu.memory_space<vmem>>, vector<128x8xf32>
    %c0_5 = arith.constant 0 : index
    %c0_6 = arith.constant 0 : index
    %3 = vector.load %arg5[%c0_5, %c0_6] : memref<8x128xf32, #tpu.memory_space<vmem>>, vector<8x128xf32>
    %c0_7 = arith.constant 0 : index
    %c0_8 = arith.constant 0 : index
    %4 = vector.load %arg2[%c0_7, %c0_8] : memref<64x512xf32, #tpu.memory_space<vmem>>, vector<64x512xf32>
    %cst = arith.constant dense<0.000000e+00> : vector<32x512xf32>
    %5 = tpu.matmul %0, %4, %cst {dimension_numbers = #tpu.dot_dimension_numbers<[1], [0], [0], [1], [0, 0, 1, 1], [], []>} : vector<32x64xf32>, vector<64x512xf32>, vector<32x512xf32> -> vector<32x512xf32>
    %6 = vector.extract_strided_slice %5 {offsets = [0, 0], sizes = [32, 128], strides = [1, 1]} : vector<32x512xf32> to vector<32x128xf32>
    %7 = vector.extract_strided_slice %5 {offsets = [0, 128], sizes = [32, 128], strides = [1, 1]} : vector<32x512xf32> to vector<32x128xf32>
    %8 = vector.extract_strided_slice %5 {offsets = [0, 256], sizes = [32, 128], strides = [1, 1]} : vector<32x512xf32> to vector<32x128xf32>
    %9 = tpu.concatenate %6, %8 in 0 : vector<32x128xf32>, vector<32x128xf32> -> vector<64x128xf32>
    %cst_9 = arith.constant dense<0.000000e+00> : vector<32x128xf32>
    %10 = tpu.matmul %1, %9, %cst_9 {dimension_numbers = #tpu.dot_dimension_numbers<[1], [0], [0], [1], [0, 0, 1, 1], [], []>} : vector<32x64xf32>, vector<64x128xf32>, vector<32x128xf32> -> vector<32x128xf32>
    %11 = arith.addf %7, %10 : vector<32x128xf32>
    %12 = vector.extract_strided_slice %5 {offsets = [0, 384], sizes = [32, 128], strides = [1, 1]} : vector<32x512xf32> to vector<32x128xf32>
    %c0_10 = arith.constant 0 : index
    %c0_11 = arith.constant 0 : index
    %13 = vector.load %arg6[%c0_10, %c0_11] : memref<6x8xf32, #tpu.memory_space<vmem>>, vector<1x8xf32>
    %c1 = arith.constant 1 : index
    %c0_12 = arith.constant 0 : index
    %14 = vector.load %arg6[%c1, %c0_12] : memref<6x8xf32, #tpu.memory_space<vmem>>, vector<1x8xf32>
    %cst_13 = arith.constant dense<0.000000e+00> : vector<128xf32>
    %15 = vector.multi_reduction <add>, %11, %cst_13 [0] : vector<32x128xf32> to vector<128xf32>
    %16 = vector.shape_cast %15 : vector<128xf32> to vector<1x128xf32>
    %17 = arith.mulf %11, %11 : vector<32x128xf32>
    %cst_14 = arith.constant dense<0.000000e+00> : vector<128xf32>
    %18 = vector.multi_reduction <add>, %17, %cst_14 [0] : vector<32x128xf32> to vector<128xf32>
    %19 = vector.shape_cast %18 : vector<128xf32> to vector<1x128xf32>
    %cst_15 = arith.constant dense<0.000000e+00> : vector<1x8xf32>
    %20 = tpu.matmul %16, %2, %cst_15 {dimension_numbers = #tpu.dot_dimension_numbers<[1], [0], [0], [1], [0, 0, 1, 1], [], []>} : vector<1x128xf32>, vector<128x8xf32>, vector<1x8xf32> -> vector<1x8xf32>
    %cst_16 = arith.constant 0.001953125 : f32
    %21 = vector.broadcast %cst_16 : f32 to vector<1x8xf32>
    %22 = arith.mulf %20, %21 : vector<1x8xf32>
    %cst_17 = arith.constant dense<0.000000e+00> : vector<1x8xf32>
    %23 = tpu.matmul %19, %2, %cst_17 {dimension_numbers = #tpu.dot_dimension_numbers<[1], [0], [0], [1], [0, 0, 1, 1], [], []>} : vector<1x128xf32>, vector<128x8xf32>, vector<1x8xf32> -> vector<1x8xf32>
    %cst_18 = arith.constant 0.001953125 : f32
    %24 = vector.broadcast %cst_18 : f32 to vector<1x8xf32>
    %25 = arith.mulf %23, %24 : vector<1x8xf32>
    %26 = arith.mulf %22, %22 : vector<1x8xf32>
    %27 = arith.subf %25, %26 : vector<1x8xf32>
    %cst_19 = arith.constant 9.99999974E-6 : f32
    %28 = vector.broadcast %cst_19 : f32 to vector<1x8xf32>
    %29 = arith.addf %27, %28 : vector<1x8xf32>
    %30 = math.rsqrt %29 : vector<1x8xf32>
    %31 = arith.mulf %13, %30 : vector<1x8xf32>
    %32 = arith.mulf %22, %31 : vector<1x8xf32>
    %33 = arith.subf %14, %32 : vector<1x8xf32>
    %cst_20 = arith.constant dense<0.000000e+00> : vector<1x128xf32>
    %34 = tpu.matmul %31, %3, %cst_20 {dimension_numbers = #tpu.dot_dimension_numbers<[1], [0], [0], [1], [0, 0, 1, 1], [], []>} : vector<1x8xf32>, vector<8x128xf32>, vector<1x128xf32> -> vector<1x128xf32>
    %cst_21 = arith.constant dense<0.000000e+00> : vector<1x128xf32>
    %35 = tpu.matmul %33, %3, %cst_21 {dimension_numbers = #tpu.dot_dimension_numbers<[1], [0], [0], [1], [0, 0, 1, 1], [], []>} : vector<1x8xf32>, vector<8x128xf32>, vector<1x128xf32> -> vector<1x128xf32>
    %36 = vector.broadcast %34 : vector<1x128xf32> to vector<32x128xf32>
    %37 = arith.mulf %11, %36 : vector<32x128xf32>
    %38 = vector.broadcast %35 : vector<1x128xf32> to vector<32x128xf32>
    %39 = arith.addf %37, %38 : vector<32x128xf32>
    %cst_22 = arith.constant 0.000000e+00 : f32
    %40 = vector.broadcast %cst_22 : f32 to vector<32x128xf32>
    %41 = arith.maximumf %39, %40 : vector<32x128xf32>
    %c0_23 = arith.constant 0 : index
    %c0_24 = arith.constant 0 : index
    %42 = vector.load %arg3[%c0_23, %c0_24] : memref<128x384xf32, #tpu.memory_space<vmem>>, vector<128x384xf32>
    %cst_25 = arith.constant dense<0.000000e+00> : vector<32x384xf32>
    %43 = tpu.matmul %41, %42, %cst_25 {dimension_numbers = #tpu.dot_dimension_numbers<[1], [0], [0], [1], [0, 0, 1, 1], [], []>} : vector<32x128xf32>, vector<128x384xf32>, vector<32x384xf32> -> vector<32x384xf32>
    %44 = vector.extract_strided_slice %43 {offsets = [0, 0], sizes = [32, 128], strides = [1, 1]} : vector<32x384xf32> to vector<32x128xf32>
    %45 = vector.extract_strided_slice %43 {offsets = [0, 128], sizes = [32, 128], strides = [1, 1]} : vector<32x384xf32> to vector<32x128xf32>
    %46 = vector.extract_strided_slice %43 {offsets = [0, 256], sizes = [32, 128], strides = [1, 1]} : vector<32x384xf32> to vector<32x128xf32>
    %47 = tpu.concatenate %44, %46 in 0 : vector<32x128xf32>, vector<32x128xf32> -> vector<64x128xf32>
    %cst_26 = arith.constant dense<0.000000e+00> : vector<32x128xf32>
    %48 = tpu.matmul %1, %47, %cst_26 {dimension_numbers = #tpu.dot_dimension_numbers<[1], [0], [0], [1], [0, 0, 1, 1], [], []>} : vector<32x64xf32>, vector<64x128xf32>, vector<32x128xf32> -> vector<32x128xf32>
    %49 = arith.addf %45, %48 : vector<32x128xf32>
    %c2 = arith.constant 2 : index
    %c0_27 = arith.constant 0 : index
    %50 = vector.load %arg6[%c2, %c0_27] : memref<6x8xf32, #tpu.memory_space<vmem>>, vector<1x8xf32>
    %c3 = arith.constant 3 : index
    %c0_28 = arith.constant 0 : index
    %51 = vector.load %arg6[%c3, %c0_28] : memref<6x8xf32, #tpu.memory_space<vmem>>, vector<1x8xf32>
    %cst_29 = arith.constant dense<0.000000e+00> : vector<128xf32>
    %52 = vector.multi_reduction <add>, %49, %cst_29 [0] : vector<32x128xf32> to vector<128xf32>
    %53 = vector.shape_cast %52 : vector<128xf32> to vector<1x128xf32>
    %54 = arith.mulf %49, %49 : vector<32x128xf32>
    %cst_30 = arith.constant dense<0.000000e+00> : vector<128xf32>
    %55 = vector.multi_reduction <add>, %54, %cst_30 [0] : vector<32x128xf32> to vector<128xf32>
    %56 = vector.shape_cast %55 : vector<128xf32> to vector<1x128xf32>
    %cst_31 = arith.constant dense<0.000000e+00> : vector<1x8xf32>
    %57 = tpu.matmul %53, %2, %cst_31 {dimension_numbers = #tpu.dot_dimension_numbers<[1], [0], [0], [1], [0, 0, 1, 1], [], []>} : vector<1x128xf32>, vector<128x8xf32>, vector<1x8xf32> -> vector<1x8xf32>
    %cst_32 = arith.constant 0.001953125 : f32
    %58 = vector.broadcast %cst_32 : f32 to vector<1x8xf32>
    %59 = arith.mulf %57, %58 : vector<1x8xf32>
    %cst_33 = arith.constant dense<0.000000e+00> : vector<1x8xf32>
    %60 = tpu.matmul %56, %2, %cst_33 {dimension_numbers = #tpu.dot_dimension_numbers<[1], [0], [0], [1], [0, 0, 1, 1], [], []>} : vector<1x128xf32>, vector<128x8xf32>, vector<1x8xf32> -> vector<1x8xf32>
    %cst_34 = arith.constant 0.001953125 : f32
    %61 = vector.broadcast %cst_34 : f32 to vector<1x8xf32>
    %62 = arith.mulf %60, %61 : vector<1x8xf32>
    %63 = arith.mulf %59, %59 : vector<1x8xf32>
    %64 = arith.subf %62, %63 : vector<1x8xf32>
    %cst_35 = arith.constant 9.99999974E-6 : f32
    %65 = vector.broadcast %cst_35 : f32 to vector<1x8xf32>
    %66 = arith.addf %64, %65 : vector<1x8xf32>
    %67 = math.rsqrt %66 : vector<1x8xf32>
    %68 = arith.mulf %50, %67 : vector<1x8xf32>
    %69 = arith.mulf %59, %68 : vector<1x8xf32>
    %70 = arith.subf %51, %69 : vector<1x8xf32>
    %cst_36 = arith.constant dense<0.000000e+00> : vector<1x128xf32>
    %71 = tpu.matmul %68, %3, %cst_36 {dimension_numbers = #tpu.dot_dimension_numbers<[1], [0], [0], [1], [0, 0, 1, 1], [], []>} : vector<1x8xf32>, vector<8x128xf32>, vector<1x128xf32> -> vector<1x128xf32>
    %cst_37 = arith.constant dense<0.000000e+00> : vector<1x128xf32>
    %72 = tpu.matmul %70, %3, %cst_37 {dimension_numbers = #tpu.dot_dimension_numbers<[1], [0], [0], [1], [0, 0, 1, 1], [], []>} : vector<1x8xf32>, vector<8x128xf32>, vector<1x128xf32> -> vector<1x128xf32>
    %73 = vector.broadcast %71 : vector<1x128xf32> to vector<32x128xf32>
    %74 = arith.mulf %49, %73 : vector<32x128xf32>
    %75 = vector.broadcast %72 : vector<1x128xf32> to vector<32x128xf32>
    %76 = arith.addf %74, %75 : vector<32x128xf32>
    %c4 = arith.constant 4 : index
    %c0_38 = arith.constant 0 : index
    %77 = vector.load %arg6[%c4, %c0_38] : memref<6x8xf32, #tpu.memory_space<vmem>>, vector<1x8xf32>
    %c5 = arith.constant 5 : index
    %c0_39 = arith.constant 0 : index
    %78 = vector.load %arg6[%c5, %c0_39] : memref<6x8xf32, #tpu.memory_space<vmem>>, vector<1x8xf32>
    %cst_40 = arith.constant dense<0.000000e+00> : vector<128xf32>
    %79 = vector.multi_reduction <add>, %12, %cst_40 [0] : vector<32x128xf32> to vector<128xf32>
    %80 = vector.shape_cast %79 : vector<128xf32> to vector<1x128xf32>
    %81 = arith.mulf %12, %12 : vector<32x128xf32>
    %cst_41 = arith.constant dense<0.000000e+00> : vector<128xf32>
    %82 = vector.multi_reduction <add>, %81, %cst_41 [0] : vector<32x128xf32> to vector<128xf32>
    %83 = vector.shape_cast %82 : vector<128xf32> to vector<1x128xf32>
    %cst_42 = arith.constant dense<0.000000e+00> : vector<1x8xf32>
    %84 = tpu.matmul %80, %2, %cst_42 {dimension_numbers = #tpu.dot_dimension_numbers<[1], [0], [0], [1], [0, 0, 1, 1], [], []>} : vector<1x128xf32>, vector<128x8xf32>, vector<1x8xf32> -> vector<1x8xf32>
    %cst_43 = arith.constant 0.001953125 : f32
    %85 = vector.broadcast %cst_43 : f32 to vector<1x8xf32>
    %86 = arith.mulf %84, %85 : vector<1x8xf32>
    %cst_44 = arith.constant dense<0.000000e+00> : vector<1x8xf32>
    %87 = tpu.matmul %83, %2, %cst_44 {dimension_numbers = #tpu.dot_dimension_numbers<[1], [0], [0], [1], [0, 0, 1, 1], [], []>} : vector<1x128xf32>, vector<128x8xf32>, vector<1x8xf32> -> vector<1x8xf32>
    %cst_45 = arith.constant 0.001953125 : f32
    %88 = vector.broadcast %cst_45 : f32 to vector<1x8xf32>
    %89 = arith.mulf %87, %88 : vector<1x8xf32>
    %90 = arith.mulf %86, %86 : vector<1x8xf32>
    %91 = arith.subf %89, %90 : vector<1x8xf32>
    %cst_46 = arith.constant 9.99999974E-6 : f32
    %92 = vector.broadcast %cst_46 : f32 to vector<1x8xf32>
    %93 = arith.addf %91, %92 : vector<1x8xf32>
    %94 = math.rsqrt %93 : vector<1x8xf32>
    %95 = arith.mulf %77, %94 : vector<1x8xf32>
    %96 = arith.mulf %86, %95 : vector<1x8xf32>
    %97 = arith.subf %78, %96 : vector<1x8xf32>
    %cst_47 = arith.constant dense<0.000000e+00> : vector<1x128xf32>
    %98 = tpu.matmul %95, %3, %cst_47 {dimension_numbers = #tpu.dot_dimension_numbers<[1], [0], [0], [1], [0, 0, 1, 1], [], []>} : vector<1x8xf32>, vector<8x128xf32>, vector<1x128xf32> -> vector<1x128xf32>
    %cst_48 = arith.constant dense<0.000000e+00> : vector<1x128xf32>
    %99 = tpu.matmul %97, %3, %cst_48 {dimension_numbers = #tpu.dot_dimension_numbers<[1], [0], [0], [1], [0, 0, 1, 1], [], []>} : vector<1x8xf32>, vector<8x128xf32>, vector<1x128xf32> -> vector<1x128xf32>
    %100 = vector.broadcast %98 : vector<1x128xf32> to vector<32x128xf32>
    %101 = arith.mulf %12, %100 : vector<32x128xf32>
    %102 = vector.broadcast %99 : vector<1x128xf32> to vector<32x128xf32>
    %103 = arith.addf %101, %102 : vector<32x128xf32>
    %104 = arith.addf %76, %103 : vector<32x128xf32>
    %cst_49 = arith.constant 0.000000e+00 : f32
    %105 = vector.broadcast %cst_49 : f32 to vector<32x128xf32>
    %106 = arith.maximumf %104, %105 : vector<32x128xf32>
    %c0_50 = arith.constant 0 : index
    %c0_51 = arith.constant 0 : index
    %107 = vector.load %arg7[%c0_50, %c0_51] : memref<32x128xf32, #tpu.memory_space<vmem>>, vector<32x128xf32>
    tpu.vector_store %arg7[%c0_50, %c0_51], %106 {strides = array<i32>} : memref<32x128xf32, #tpu.memory_space<vmem>>, vector<32x128xf32>,
    return
  }
}

</mosaic_0001>

<llo_original>
// kernel: tpu_custom_call.1
$region0: #{tpu_custom_call.1}
  #allocation0 [shape = 'u32[]', space=smem, size = 0x4, offset = 0x4, fixed_abs, tag = 'smem constant byte address 0x4 - core index']
  #allocation1 [shape = 'u32[72,128]{1,0:T(1,128)}', space=vmem, size = 0x9000, scoped, tag = 'internal scratch']
  %s0 = inlined_call_operand.vmem [shape: f32[32,64], index: 0, kind: input, shape index: {}]
  %s1 = inlined_call_operand.vmem [shape: f32[32,64], index: 1, kind: input, shape index: {}]
  %s2 = inlined_call_operand.hbm [shape: f32[64,512], index: 2, kind: input, shape index: {}]
  %s3 = inlined_call_operand.hbm [shape: f32[128,384], index: 3, kind: input, shape index: {}]
  %s4 = inlined_call_operand.vmem [shape: f32[128,8], index: 4, kind: input, shape index: {}]
  %s5 = inlined_call_operand.vmem [shape: f32[8,128], index: 5, kind: input, shape index: {}]
  %s6 = inlined_call_operand.vmem [shape: f32[6,8], index: 6, kind: input, shape index: {}]
  %s7 = inlined_call_operand.hbm [shape: f32[32,128], index: 7, kind: output, shape index: {}]
  %s8 = sld [smem:[#allocation0]]
  $region46: #{tpu_custom_call.1} parent=0
    _
  %s10 = ssub.s32 1, %s8
  %s11 = scalar_select 0, %s10, %s8
  $region1: #{tpu_custom_call.1} parent=0
    #allocation2 [shape = 'u8[131072]{0}', space=vmem, size = 0x20000, scoped, tag = 'input window, operand 2, single buffered']
    #allocation3 [shape = 's32[1]{0}', space=sflag, size = 0x4, scoped, tag = 'scoped memory for tpu_custom_call.1']
    #allocation4 [shape = 's32[1]{0}', space=sflag, size = 0x4, scoped, tag = 'scoped memory for tpu_custom_call.1']
    #allocation5 [shape = 'u8[196608]{0}', space=vmem, size = 0x30000, scoped, tag = 'input window, operand 3, single buffered']
    #allocation6 [shape = 's32[1]{0}', space=sflag, size = 0x4, scoped, tag = 'scoped memory for tpu_custom_call.1']
    #allocation7 [shape = 'u8[16384]{0}', space=vmem, size = 0x4000, scoped, tag = 'output window, operand 0, single buffered']
    %12 = vsyncpa [#allocation3], 0
    %13 = vsyncpa [#allocation6], 0
    %14 = vsyncpa [#allocation4], 0
    // Predicated region
    $region2: #{tpu_custom_call.1} parent=1 // pred_check
      _
    $region3: #{tpu_custom_call.1} parent=1 // pred_check_branch
      %16 = sbr.rel (0) target = $region5
    $region4: #{tpu_custom_call.1} parent=1 // pred_region
      _
    $region5: #{tpu_custom_call.1} parent=1 // pred_fallthru
      _
    // Predicated region
    $region6: #{tpu_custom_call.1} parent=1 // pred_check
      _
    $region7: #{tpu_custom_call.1} parent=1 // pred_check_branch
      %18 = sbr.rel (0) target = $region9
    $region8: #{tpu_custom_call.1} parent=1 // pred_region
      _
    $region9: #{tpu_custom_call.1} parent=1 // pred_fallthru
      _
    // Predicated region
    $region10: #{tpu_custom_call.1} parent=1 // pred_check
      _
    $region11: #{tpu_custom_call.1} parent=1 // pred_check_branch
      %20 = sbr.rel (0) target = $region13
    $region12: #{tpu_custom_call.1} parent=1 // pred_region
      %22 = vsyncadd [#allocation3], 0
      %s23 = sshll.u32 %s2, 4
      %s24 = int_to_ptr.hbm [resolvable:$true] %s23
      %s25 = sshll.u32 [#allocation2], 4
      %s26 = int_to_ptr.vmem [resolvable:$true] %s25
      %31 = dma.hbm_to_vmem [thread:$0]  %s24, 4096, %s26, [#allocation3], 512, 512, 32
    $region13: #{tpu_custom_call.1} parent=1 // pred_fallthru
      _
    // Predicated region
    $region14: #{tpu_custom_call.1} parent=1 // pred_check
      _
    $region15: #{tpu_custom_call.1} parent=1 // pred_check_branch
      %33 = sbr.rel (0) target = $region17
    $region16: #{tpu_custom_call.1} parent=1 // pred_region
      %35 = vsyncadd [#allocation6], 0
      %s36 = sshll.u32 %s3, 4
      %s37 = int_to_ptr.hbm [resolvable:$true] %s36
      %s38 = sshll.u32 [#allocation5], 4
      %s39 = int_to_ptr.vmem [resolvable:$true] %s38
      %44 = dma.hbm_to_vmem [thread:$0]  %s37, 6144, %s39, [#allocation6], 384, 384, 24
    $region17: #{tpu_custom_call.1} parent=1 // pred_fallthru
      _
    // Predicated region
    $region18: #{tpu_custom_call.1} parent=1 // pred_check
      _
    $region19: #{tpu_custom_call.1} parent=1 // pred_check_branch
      %46 = sbr.rel (0) target = $region21
    $region20: #{tpu_custom_call.1} parent=1 // pred_region
      _
    $region21: #{tpu_custom_call.1} parent=1 // pred_fallthru
      _
    // Predicated region
    $region22: #{tpu_custom_call.1} parent=1 // pred_check
      _
    $region23: #{tpu_custom_call.1} parent=1 // pred_check_branch
      %48 = sbr.rel (0) target = $region25
    $region24: #{tpu_custom_call.1} parent=1 // pred_region
      _
    $region25: #{tpu_custom_call.1} parent=1 // pred_fallthru
      _
    // Predicated region
    $region26: #{tpu_custom_call.1} parent=1 // pred_check
      _
    $region27: #{tpu_custom_call.1} parent=1 // pred_check_branch
      %50 = sbr.rel (0) target = $region29
    $region28: #{tpu_custom_call.1} parent=1 // pred_region
      _
    $region29: #{tpu_custom_call.1} parent=1 // pred_fallthru
      _
    // Predicated region
    $region30: #{tpu_custom_call.1} parent=1 // pred_check
      _
    $region31: #{tpu_custom_call.1} parent=1 // pred_check_branch
      %52 = sbr.rel (0) target = $region33
    $region32: #{tpu_custom_call.1} parent=1 // pred_region
      %54 = dma.done [#allocation3], 4096
    $region33: #{tpu_custom_call.1} parent=1 // pred_fallthru
      _
    // Predicated region
    $region34: #{tpu_custom_call.1} parent=1 // pred_check
      _
    $region35: #{tpu_custom_call.1} parent=1 // pred_check_branch
      %56 = sbr.rel (0) target = $region37
    $region36: #{tpu_custom_call.1} parent=1 // pred_region
      %58 = dma.done [#allocation6], 6144
    $region37: #{tpu_custom_call.1} parent=1 // pred_fallthru
      _
    %v59 = vld [vmem:[%s0] sm:$0xff]
    %v60 = vld [vmem:[%s0 + $0x8] sm:$0xff]
    %v61 = vld [vmem:[%s0 + $0x10] sm:$0xff]
    %v62 = vld [vmem:[%s0 + $0x18] sm:$0xff]
    %v63 = vld [vmem:[%s1] sm:$0xff]
    %v64 = vld [vmem:[%s1 + $0x8] sm:$0xff]
    %v65 = vld [vmem:[%s1 + $0x10] sm:$0xff]
    %v66 = vld [vmem:[%s1 + $0x18] sm:$0xff]
    %v67 = vld [vmem:[%s4] sm:$0xff]
    %v68 = vld [vmem:[%s4 + $0x8] sm:$0xff]
    %v69 = vld [vmem:[%s4 + $0x10] sm:$0xff]
    %v70 = vld [vmem:[%s4 + $0x18] sm:$0xff]
    %v71 = vld [vmem:[%s4 + $0x20] sm:$0xff]
    %v72 = vld [vmem:[%s4 + $0x28] sm:$0xff]
    %v73 = vld [vmem:[%s4 + $0x30] sm:$0xff]
    %v74 = vld [vmem:[%s4 + $0x38] sm:$0xff]
    %v75 = vld [vmem:[%s4 + $0x40] sm:$0xff]
    %v76 = vld [vmem:[%s4 + $0x48] sm:$0xff]
    %v77 = vld [vmem:[%s4 + $0x50] sm:$0xff]
    %v78 = vld [vmem:[%s4 + $0x58] sm:$0xff]
    %v79 = vld [vmem:[%s4 + $0x60] sm:$0xff]
    %v80 = vld [vmem:[%s4 + $0x68] sm:$0xff]
    %v81 = vld [vmem:[%s4 + $0x70] sm:$0xff]
    %v82 = vld [vmem:[%s4 + $0x78] sm:$0xff]
    %v83 = vld [vmem:[%s5] sm:$0xff]
    %v84 = vld [vmem:[#allocation2] sm:$0xff]
    %v85 = vld [vmem:[#allocation2 + $0x8] sm:$0xff]
    %v86 = vld [vmem:[#allocation2 + $0x10] sm:$0xff]
    %v87 = vld [vmem:[#allocation2 + $0x18] sm:$0xff]
    %v88 = vld [vmem:[#allocation2 + $0x20] sm:$0xff]
    %v89 = vld [vmem:[#allocation2 + $0x28] sm:$0xff]
    %v90 = vld [vmem:[#allocation2 + $0x30] sm:$0xff]
    %v91 = vld [vmem:[#allocation2 + $0x38] sm:$0xff]
    %v92 = vld [vmem:[#allocation2 + $0x40] sm:$0xff]
    %v93 = vld [vmem:[#allocation2 + $0x48] sm:$0xff]
    %v94 = vld [vmem:[#allocation2 + $0x50] sm:$0xff]
    %v95 = vld [vmem:[#allocation2 + $0x58] sm:$0xff]
    %v96 = vld [vmem:[#allocation2 + $0x60] sm:$0xff]
    %v97 = vld [vmem:[#allocation2 + $0x68] sm:$0xff]
    %v98 = vld [vmem:[#allocation2 + $0x70] sm:$0xff]
    %v99 = vld [vmem:[#allocation2 + $0x78] sm:$0xff]
    %v100 = vld [vmem:[#allocation2 + $0x80] sm:$0xff]
    %v101 = vld [vmem:[#allocation2 + $0x88] sm:$0xff]
    %v102 = vld [vmem:[#allocation2 + $0x90] sm:$0xff]
    %v103 = vld [vmem:[#allocation2 + $0x98] sm:$0xff]
    %v104 = vld [vmem:[#allocation2 + $0xa0] sm:$0xff]
    %v105 = vld [vmem:[#allocation2 + $0xa8] sm:$0xff]
    %v106 = vld [vmem:[#allocation2 + $0xb0] sm:$0xff]
    %v107 = vld [vmem:[#allocation2 + $0xb8] sm:$0xff]
    %v108 = vld [vmem:[#allocation2 + $0xc0] sm:$0xff]
    %v109 = vld [vmem:[#allocation2 + $0xc8] sm:$0xff]
    %v110 = vld [vmem:[#allocation2 + $0xd0] sm:$0xff]
    %v111 = vld [vmem:[#allocation2 + $0xd8] sm:$0xff]
    %v112 = vld [vmem:[#allocation2 + $0xe0] sm:$0xff]
    %v113 = vld [vmem:[#allocation2 + $0xe8] sm:$0xff]
    %v114 = vld [vmem:[#allocation2 + $0xf0] sm:$0xff]
    %v115 = vld [vmem:[#allocation2 + $0xf8] sm:$0xff]
    %vm116 = vcmask 523264
    %v118 = vsel %vm116, %v59, 0
    %v121 = vsel %vm116, %v60, 0
    %v124 = vsel %vm116, %v61, 0
    %v127 = vsel %vm116, %v62, 0
    %129 = vmatpush.msra.mxu0 0.0
    %130 = vmatpush.msra.mxu0 0.0
    %131 = vmatpush.msra.mxu0 0.0
    %132 = vmatpush.msra.mxu0 0.0
    %133 = vmatpush.msra.mxu0 0.0
    %134 = vmatpush.msra.mxu0 0.0
    %135 = vmatpush.msra.mxu0 0.0
    %136 = vmatpush.msra.mxu0 0.0
    %137 = vmatpush.msra.mxu0 %v112
    %138 = vmatpush.msra.mxu0 %v108
    %139 = vmatpush.msra.mxu0 %v104
    %140 = vmatpush.msra.mxu0 %v100
    %141 = vmatpush.msra.mxu0 %v96
    %142 = vmatpush.msra.mxu0 %v92
    %143 = vmatpush.msra.mxu0 %v88
    %144 = vmatpush.msra.mxu0 %v84
    %145 = vmatmul.f32.gmra.mxu0 %v118
    %v146 = vpop.f32.mrf.mxu0
    %v147 = vadd.f32 0.0, %v146
    %148 = vmatmul.f32.gmra.mxu0 %v121
    %v149 = vpop.f32.mrf.mxu0
    %v150 = vadd.f32 0.0, %v149
    %151 = vmatmul.f32.gmra.mxu0 %v124
    %v152 = vpop.f32.mrf.mxu0
    %v153 = vadd.f32 0.0, %v152
    %154 = vmatmul.f32.gmra.mxu0 %v127
    %v155 = vpop.f32.mrf.mxu0
    %v156 = vadd.f32 0.0, %v155
    %157 = vdwg.mxu0
    %158 = vmatpush.msra.mxu0 0.0
    %159 = vmatpush.msra.mxu0 0.0
    %160 = vmatpush.msra.mxu0 0.0
    %161 = vmatpush.msra.mxu0 0.0
    %162 = vmatpush.msra.mxu0 0.0
    %163 = vmatpush.msra.mxu0 0.0
    %164 = vmatpush.msra.mxu0 0.0
    %165 = vmatpush.msra.mxu0 0.0
    %166 = vmatpush.msra.mxu0 %v113
    %167 = vmatpush.msra.mxu0 %v109
    %168 = vmatpush.msra.mxu0 %v105
    %169 = vmatpush.msra.mxu0 %v101
    %170 = vmatpush.msra.mxu0 %v97
    %171 = vmatpush.msra.mxu0 %v93
    %172 = vmatpush.msra.mxu0 %v89
    %173 = vmatpush.msra.mxu0 %v85
    %174 = vmatmul.f32.gmra.mxu0 %v118
    %v175 = vpop.f32.mrf.mxu0
    %v176 = vadd.f32 0.0, %v175
    %177 = vmatmul.f32.gmra.mxu0 %v121
    %v178 = vpop.f32.mrf.mxu0
    %v179 = vadd.f32 0.0, %v178
    %180 = vmatmul.f32.gmra.mxu0 %v124
    %v181 = vpop.f32.mrf.mxu0
    %v182 = vadd.f32 0.0, %v181
    %183 = vmatmul.f32.gmra.mxu0 %v127
    %v184 = vpop.f32.mrf.mxu0
    %v185 = vadd.f32 0.0, %v184
    %186 = vdwg.mxu0
    %187 = vmatpush.msra.mxu0 0.0
    %188 = vmatpush.msra.mxu0 0.0
    %189 = vmatpush.msra.mxu0 0.0
    %190 = vmatpush.msra.mxu0 0.0
    %191 = vmatpush.msra.mxu0 0.0
    %192 = vmatpush.msra.mxu0 0.0
    %193 = vmatpush.msra.mxu0 0.0
    %194 = vmatpush.msra.mxu0 0.0
    %195 = vmatpush.msra.mxu0 %v114
    %196 = vmatpush.msra.mxu0 %v110
    %197 = vmatpush.msra.mxu0 %v106
    %198 = vmatpush.msra.mxu0 %v102
    %199 = vmatpush.msra.mxu0 %v98
    %200 = vmatpush.msra.mxu0 %v94
    %201 = vmatpush.msra.mxu0 %v90
    %202 = vmatpush.msra.mxu0 %v86
    %203 = vmatmul.f32.gmra.mxu0 %v118
    %v204 = vpop.f32.mrf.mxu0
    %v205 = vadd.f32 0.0, %v204
    %206 = vmatmul.f32.gmra.mxu0 %v121
    %v207 = vpop.f32.mrf.mxu0
    %v208 = vadd.f32 0.0, %v207
    %209 = vmatmul.f32.gmra.mxu0 %v124
    %v210 = vpop.f32.mrf.mxu0
    %v211 = vadd.f32 0.0, %v210
    %212 = vmatmul.f32.gmra.mxu0 %v127
    %v213 = vpop.f32.mrf.mxu0
    %v214 = vadd.f32 0.0, %v213
    %215 = vdwg.mxu0
    %216 = vmatpush.msra.mxu0 0.0
    %217 = vmatpush.msra.mxu0 0.0
    %218 = vmatpush.msra.mxu0 0.0
    %219 = vmatpush.msra.mxu0 0.0
    %220 = vmatpush.msra.mxu0 0.0
    %221 = vmatpush.msra.mxu0 0.0
    %222 = vmatpush.msra.mxu0 0.0
    %223 = vmatpush.msra.mxu0 0.0
    %224 = vmatpush.msra.mxu0 %v115
    %225 = vmatpush.msra.mxu0 %v111
    %226 = vmatpush.msra.mxu0 %v107
    %227 = vmatpush.msra.mxu0 %v103
    %228 = vmatpush.msra.mxu0 %v99
    %229 = vmatpush.msra.mxu0 %v95
    %230 = vmatpush.msra.mxu0 %v91
    %231 = vmatpush.msra.mxu0 %v87
    %232 = vmatmul.f32.gmra.mxu0 %v118
    %v233 = vpop.f32.mrf.mxu0
    %v234 = vadd.f32 0.0, %v233
    %235 = vmatmul.f32.gmra.mxu0 %v121
    %v236 = vpop.f32.mrf.mxu0
    %v237 = vadd.f32 0.0, %v236
    %238 = vmatmul.f32.gmra.mxu0 %v124
    %v239 = vpop.f32.mrf.mxu0
    %v240 = vadd.f32 0.0, %v239
    %241 = vmatmul.f32.gmra.mxu0 %v127
    %v242 = vpop.f32.mrf.mxu0
    %v243 = vadd.f32 0.0, %v242
    %244 = vdwg.mxu0
    %v246 = vsel %vm116, %v63, 0
    %v249 = vsel %vm116, %v64, 0
    %v252 = vsel %vm116, %v65, 0
    %v255 = vsel %vm116, %v66, 0
    %257 = vmatpush.msra.mxu0 0.0
    %258 = vmatpush.msra.mxu0 0.0
    %259 = vmatpush.msra.mxu0 0.0
    %260 = vmatpush.msra.mxu0 0.0
    %261 = vmatpush.msra.mxu0 0.0
    %262 = vmatpush.msra.mxu0 0.0
    %263 = vmatpush.msra.mxu0 0.0
    %264 = vmatpush.msra.mxu0 0.0
    %265 = vmatpush.msra.mxu0 %v214
    %266 = vmatpush.msra.mxu0 %v211
    %267 = vmatpush.msra.mxu0 %v208
    %268 = vmatpush.msra.mxu0 %v205
    %269 = vmatpush.msra.mxu0 %v156
    %270 = vmatpush.msra.mxu0 %v153
    %271 = vmatpush.msra.mxu0 %v150
    %272 = vmatpush.msra.mxu0 %v147
    %273 = vmatmul.f32.gmra.mxu0 %v246
    %v274 = vpop.f32.mrf.mxu0
    %v275 = vadd.f32 0.0, %v274
    %276 = vmatmul.f32.gmra.mxu0 %v249
    %v277 = vpop.f32.mrf.mxu0
    %v278 = vadd.f32 0.0, %v277
    %279 = vmatmul.f32.gmra.mxu0 %v252
    %v280 = vpop.f32.mrf.mxu0
    %v281 = vadd.f32 0.0, %v280
    %282 = vmatmul.f32.gmra.mxu0 %v255
    %v283 = vpop.f32.mrf.mxu0
    %v284 = vadd.f32 0.0, %v283
    %285 = vdwg.mxu0
    %v286 = vadd.f32 %v176, %v275
    %v287 = vadd.f32 %v179, %v278
    %v288 = vadd.f32 %v182, %v281
    %v289 = vadd.f32 %v185, %v284
    %v290 = vld [vmem:[%s6] sm:$0x1]
    %v291 = vld [vmem:[%s6 + $0x1] sm:$0x1]
    %v292 = vadd.f32 %v286, %v287
    %v293 = vadd.f32 %v292, %v288
    %v294 = vadd.f32 %v293, %v289
    %v295 = vrot.slane %v294, 4
    %v296 = vadd.f32 %v294, %v295
    %v297 = vrot.slane %v296, 2
    %v298 = vadd.f32 %v296, %v297
    %v299 = vrot.slane %v298, 1
    %v300 = vadd.f32 %v298, %v299
    %v301 = vmul.f32 %v286, %v286
    %v302 = vmul.f32 %v287, %v287
    %v303 = vmul.f32 %v288, %v288
    %v304 = vmul.f32 %v289, %v289
    %v305 = vadd.f32 %v301, %v302
    %v306 = vadd.f32 %v305, %v303
    %v307 = vadd.f32 %v306, %v304
    %v308 = vrot.slane %v307, 4
    %v309 = vadd.f32 %v307, %v308
    %v310 = vrot.slane %v309, 2
    %v311 = vadd.f32 %v309, %v310
    %v312 = vrot.slane %v311, 1
    %v313 = vadd.f32 %v311, %v312
    %314 = vmatpush.msra.mxu0 %v82
    %315 = vmatpush.msra.mxu0 %v81
    %316 = vmatpush.msra.mxu0 %v80
    %317 = vmatpush.msra.mxu0 %v79
    %318 = vmatpush.msra.mxu0 %v78
    %319 = vmatpush.msra.mxu0 %v77
    %320 = vmatpush.msra.mxu0 %v76
    %321 = vmatpush.msra.mxu0 %v75
    %322 = vmatpush.msra.mxu0 %v74
    %323 = vmatpush.msra.mxu0 %v73
    %324 = vmatpush.msra.mxu0 %v72
    %325 = vmatpush.msra.mxu0 %v71
    %326 = vmatpush.msra.mxu0 %v70
    %327 = vmatpush.msra.mxu0 %v69
    %328 = vmatpush.msra.mxu0 %v68
    %329 = vmatpush.msra.mxu0 %v67
    %330 = vmatmul.f32.gmra.mxu0 %v300
    %v331 = vpop.f32.mrf.mxu0
    %v332 = vadd.f32 0.0, %v331
    %333 = vdwg.mxu0
    %v334 = vmul.f32 %v332, 0.001953125
    %335 = vmatpush.msra.mxu0 %v82
    %336 = vmatpush.msra.mxu0 %v81
    %337 = vmatpush.msra.mxu0 %v80
    %338 = vmatpush.msra.mxu0 %v79
    %339 = vmatpush.msra.mxu0 %v78
    %340 = vmatpush.msra.mxu0 %v77
    %341 = vmatpush.msra.mxu0 %v76
    %342 = vmatpush.msra.mxu0 %v75
    %343 = vmatpush.msra.mxu0 %v74
    %344 = vmatpush.msra.mxu0 %v73
    %345 = vmatpush.msra.mxu0 %v72
    %346 = vmatpush.msra.mxu0 %v71
    %347 = vmatpush.msra.mxu0 %v70
    %348 = vmatpush.msra.mxu0 %v69
    %349 = vmatpush.msra.mxu0 %v68
    %350 = vmatpush.msra.mxu0 %v67
    %351 = vmatmul.f32.gmra.mxu0 %v313
    %v352 = vpop.f32.mrf.mxu0
    %v353 = vadd.f32 0.0, %v352
    %354 = vdwg.mxu0
    %v355 = vmul.f32 %v353, 0.001953125
    %v356 = vmul.f32 %v334, %v334
    %v357 = vsub.f32 %v355, %v356
    %v358 = vadd.f32 %v357, 1e-05
    %v359 = vrsqrt.pop %v358
    %v360 = vmul.f32 %v359, %v358
    %v361 = vmul.f32 %v360, %v359
    %v362 = vmul.f32 0.5, %v361
    %v363 = vsub.f32 1.5, %v362
    %v364 = vmul.f32 %v359, %v363
    %vm365 = vweird.f32 %v358
    %vm366 = vweird.f32 %v359
    %vm367 = vmor %vm365, %vm366
    %v368 = vsel %vm367, %v359, %v364
    %v369 = vmul.f32 %v290, %v368
    %v370 = vmul.f32 %v334, %v369
    %v371 = vsub.f32 %v291, %v370
    %vm372 = vcmask 64512
    %v374 = vsel %vm372, %v369, 0
    %376 = vmatpush.msra.mxu0 0.0
    %377 = vmatpush.msra.mxu0 0.0
    %378 = vmatpush.msra.mxu0 0.0
    %379 = vmatpush.msra.mxu0 0.0
    %380 = vmatpush.msra.mxu0 0.0
    %381 = vmatpush.msra.mxu0 0.0
    %382 = vmatpush.msra.mxu0 0.0
    %383 = vmatpush.msra.mxu0 0.0
    %384 = vmatpush.msra.mxu0 0.0
    %385 = vmatpush.msra.mxu0 0.0
    %386 = vmatpush.msra.mxu0 0.0
    %387 = vmatpush.msra.mxu0 0.0
    %388 = vmatpush.msra.mxu0 0.0
    %389 = vmatpush.msra.mxu0 0.0
    %390 = vmatpush.msra.mxu0 0.0
    %391 = vmatpush.msra.mxu0 %v83
    %392 = vmatmul.f32.gmra.mxu0 %v374
    %v393 = vpop.f32.mrf.mxu0
    %v394 = vadd.f32 0.0, %v393
    %395 = vdwg.mxu0
    %v397 = vsel %vm372, %v371, 0
    %399 = vmatpush.msra.mxu0 0.0
    %400 = vmatpush.msra.mxu0 0.0
    %401 = vmatpush.msra.mxu0 0.0
    %402 = vmatpush.msra.mxu0 0.0
    %403 = vmatpush.msra.mxu0 0.0
    %404 = vmatpush.msra.mxu0 0.0
    %405 = vmatpush.msra.mxu0 0.0
    %406 = vmatpush.msra.mxu0 0.0
    %407 = vmatpush.msra.mxu0 0.0
    %408 = vmatpush.msra.mxu0 0.0
    %409 = vmatpush.msra.mxu0 0.0
    %410 = vmatpush.msra.mxu0 0.0
    %411 = vmatpush.msra.mxu0 0.0
    %412 = vmatpush.msra.mxu0 0.0
    %413 = vmatpush.msra.mxu0 0.0
    %414 = vmatpush.msra.mxu0 %v83
    %415 = vmatmul.f32.gmra.mxu0 %v397
    %v416 = vpop.f32.mrf.mxu0
    %v417 = vadd.f32 0.0, %v416
    %418 = vdwg.mxu0
    %v419 = vperm.slane %v394, 0
    %v420 = vmul.f32 %v286, %v419
    %v421 = vmul.f32 %v287, %v419
    %v422 = vmul.f32 %v288, %v419
    %v423 = vmul.f32 %v289, %v419
    %v424 = vperm.slane %v417, 0
    %v425 = vadd.f32 %v420, %v424
    %v426 = vadd.f32 %v421, %v424
    %v427 = vadd.f32 %v422, %v424
    %v428 = vadd.f32 %v423, %v424
    %v429 = vmax.f32 %v425, 0.0
    %v430 = vmax.f32 %v426, 0.0
    %v431 = vmax.f32 %v427, 0.0
    %v432 = vmax.f32 %v428, 0.0
    %v433 = vld [vmem:[#allocation5] sm:$0xff]
    %v434 = vld [vmem:[#allocation5 + $0x8] sm:$0xff]
    %v435 = vld [vmem:[#allocation5 + $0x10] sm:$0xff]
    %v436 = vld [vmem:[#allocation5 + $0x18] sm:$0xff]
    %v437 = vld [vmem:[#allocation5 + $0x20] sm:$0xff]
    %v438 = vld [vmem:[#allocation5 + $0x28] sm:$0xff]
    %v439 = vld [vmem:[#allocation5 + $0x30] sm:$0xff]
    %v440 = vld [vmem:[#allocation5 + $0x38] sm:$0xff]
    %v441 = vld [vmem:[#allocation5 + $0x40] sm:$0xff]
    %v442 = vld [vmem:[#allocation5 + $0x48] sm:$0xff]
    %v443 = vld [vmem:[#allocation5 + $0x50] sm:$0xff]
    %v444 = vld [vmem:[#allocation5 + $0x58] sm:$0xff]
    %v445 = vld [vmem:[#allocation5 + $0x60] sm:$0xff]
    %v446 = vld [vmem:[#allocation5 + $0x68] sm:$0xff]
    %v447 = vld [vmem:[#allocation5 + $0x70] sm:$0xff]
    %v448 = vld [vmem:[#allocation5 + $0x78] sm:$0xff]
    %v449 = vld [vmem:[#allocation5 + $0x80] sm:$0xff]
    %v450 = vld [vmem:[#allocation5 + $0x88] sm:$0xff]
    %v451 = vld [vmem:[#allocation5 + $0x90] sm:$0xff]
    %v452 = vld [vmem:[#allocation5 + $0x98] sm:$0xff]
    %v453 = vld [vmem:[#allocation5 + $0xa0] sm:$0xff]
    %v454 = vld [vmem:[#allocation5 + $0xa8] sm:$0xff]
    %v455 = vld [vmem:[#allocation5 + $0xb0] sm:$0xff]
    %v456 = vld [vmem:[#allocation5 + $0xb8] sm:$0xff]
    %v457 = vld [vmem:[#allocation5 + $0xc0] sm:$0xff]
    %v458 = vld [vmem:[#allocation5 + $0xc8] sm:$0xff]
    %v459 = vld [vmem:[#allocation5 + $0xd0] sm:$0xff]
    %v460 = vld [vmem:[#allocation5 + $0xd8] sm:$0xff]
    %v461 = vld [vmem:[#allocation5 + $0xe0] sm:$0xff]
    %v462 = vld [vmem:[#allocation5 + $0xe8] sm:$0xff]
    %v463 = vld [vmem:[#allocation5 + $0xf0] sm:$0xff]
    %v464 = vld [vmem:[#allocation5 + $0xf8] sm:$0xff]
    %v465 = vld [vmem:[#allocation5 + $0x100] sm:$0xff]
    %v466 = vld [vmem:[#allocation5 + $0x108] sm:$0xff]
    %v467 = vld [vmem:[#allocation5 + $0x110] sm:$0xff]
    %v468 = vld [vmem:[#allocation5 + $0x118] sm:$0xff]
    %v469 = vld [vmem:[#allocation5 + $0x120] sm:$0xff]
    %v470 = vld [vmem:[#allocation5 + $0x128] sm:$0xff]
    %v471 = vld [vmem:[#allocation5 + $0x130] sm:$0xff]
    %v472 = vld [vmem:[#allocation5 + $0x138] sm:$0xff]
    %v473 = vld [vmem:[#allocation5 + $0x140] sm:$0xff]
    %v474 = vld [vmem:[#allocation5 + $0x148] sm:$0xff]
    %v475 = vld [vmem:[#allocation5 + $0x150] sm:$0xff]
    %v476 = vld [vmem:[#allocation5 + $0x158] sm:$0xff]
    %v477 = vld [vmem:[#allocation5 + $0x160] sm:$0xff]
    %v478 = vld [vmem:[#allocation5 + $0x168] sm:$0xff]
    %v479 = vld [vmem:[#allocation5 + $0x170] sm:$0xff]
    %v480 = vld [vmem:[#allocation5 + $0x178] sm:$0xff]
    %481 = vmatpush.msra.mxu0 %v478
    %482 = vmatpush.msra.mxu0 %v475
    %483 = vmatpush.msra.mxu0 %v472
    %484 = vmatpush.msra.mxu0 %v469
    %485 = vmatpush.msra.mxu0 %v466
    %486 = vmatpush.msra.mxu0 %v463
    %487 = vmatpush.msra.mxu0 %v460
    %488 = vmatpush.msra.mxu0 %v457
    %489 = vmatpush.msra.mxu0 %v454
    %490 = vmatpush.msra.mxu0 %v451
    %491 = vmatpush.msra.mxu0 %v448
    %492 = vmatpush.msra.mxu0 %v445
    %493 = vmatpush.msra.mxu0 %v442
    %494 = vmatpush.msra.mxu0 %v439
    %495 = vmatpush.msra.mxu0 %v436
    %496 = vmatpush.msra.mxu0 %v433
    %497 = vmatmul.f32.gmra.mxu0 %v429
    %v498 = vpop.f32.mrf.mxu0
    %v499 = vadd.f32 0.0, %v498
    %500 = vmatmul.f32.gmra.mxu0 %v430
    %v501 = vpop.f32.mrf.mxu0
    %v502 = vadd.f32 0.0, %v501
    %503 = vmatmul.f32.gmra.mxu0 %v431
    %v504 = vpop.f32.mrf.mxu0
    %v505 = vadd.f32 0.0, %v504
    %506 = vmatmul.f32.gmra.mxu0 %v432
    %v507 = vpop.f32.mrf.mxu0
    %v508 = vadd.f32 0.0, %v507
    %509 = vdwg.mxu0
    %510 = vmatpush.msra.mxu0 %v479
    %511 = vmatpush.msra.mxu0 %v476
    %512 = vmatpush.msra.mxu0 %v473
    %513 = vmatpush.msra.mxu0 %v470
    %514 = vmatpush.msra.mxu0 %v467
    %515 = vmatpush.msra.mxu0 %v464
    %516 = vmatpush.msra.mxu0 %v461
    %517 = vmatpush.msra.mxu0 %v458
    %518 = vmatpush.msra.mxu0 %v455
    %519 = vmatpush.msra.mxu0 %v452
    %520 = vmatpush.msra.mxu0 %v449
    %521 = vmatpush.msra.mxu0 %v446
    %522 = vmatpush.msra.mxu0 %v443
    %523 = vmatpush.msra.mxu0 %v440
    %524 = vmatpush.msra.mxu0 %v437
    %525 = vmatpush.msra.mxu0 %v434
    %526 = vmatmul.f32.gmra.mxu0 %v429
    %v527 = vpop.f32.mrf.mxu0
    %v528 = vadd.f32 0.0, %v527
    %529 = vmatmul.f32.gmra.mxu0 %v430
    %v530 = vpop.f32.mrf.mxu0
    %v531 = vadd.f32 0.0, %v530
    %532 = vmatmul.f32.gmra.mxu0 %v431
    %v533 = vpop.f32.mrf.mxu0
    %v534 = vadd.f32 0.0, %v533
    %535 = vmatmul.f32.gmra.mxu0 %v432
    %v536 = vpop.f32.mrf.mxu0
    %v537 = vadd.f32 0.0, %v536
    %538 = vdwg.mxu0
    %539 = vmatpush.msra.mxu0 %v480
    %540 = vmatpush.msra.mxu0 %v477
    %541 = vmatpush.msra.mxu0 %v474
    %542 = vmatpush.msra.mxu0 %v471
    %543 = vmatpush.msra.mxu0 %v468
    %544 = vmatpush.msra.mxu0 %v465
    %545 = vmatpush.msra.mxu0 %v462
    %546 = vmatpush.msra.mxu0 %v459
    %547 = vmatpush.msra.mxu0 %v456
    %548 = vmatpush.msra.mxu0 %v453
    %549 = vmatpush.msra.mxu0 %v450
    %550 = vmatpush.msra.mxu0 %v447
    %551 = vmatpush.msra.mxu0 %v444
    %552 = vmatpush.msra.mxu0 %v441
    %553 = vmatpush.msra.mxu0 %v438
    %554 = vmatpush.msra.mxu0 %v435
    %555 = vmatmul.f32.gmra.mxu0 %v429
    %v556 = vpop.f32.mrf.mxu0
    %v557 = vadd.f32 0.0, %v556
    %558 = vmatmul.f32.gmra.mxu0 %v430
    %v559 = vpop.f32.mrf.mxu0
    %v560 = vadd.f32 0.0, %v559
    %561 = vmatmul.f32.gmra.mxu0 %v431
    %v562 = vpop.f32.mrf.mxu0
    %v563 = vadd.f32 0.0, %v562
    %564 = vmatmul.f32.gmra.mxu0 %v432
    %v565 = vpop.f32.mrf.mxu0
    %v566 = vadd.f32 0.0, %v565
    %567 = vdwg.mxu0
    %568 = vmatpush.msra.mxu0 0.0
    %569 = vmatpush.msra.mxu0 0.0
    %570 = vmatpush.msra.mxu0 0.0
    %571 = vmatpush.msra.mxu0 0.0
    %572 = vmatpush.msra.mxu0 0.0
    %573 = vmatpush.msra.mxu0 0.0
    %574 = vmatpush.msra.mxu0 0.0
    %575 = vmatpush.msra.mxu0 0.0
    %576 = vmatpush.msra.mxu0 %v566
    %577 = vmatpush.msra.mxu0 %v563
    %578 = vmatpush.msra.mxu0 %v560
    %579 = vmatpush.msra.mxu0 %v557
    %580 = vmatpush.msra.mxu0 %v508
    %581 = vmatpush.msra.mxu0 %v505
    %582 = vmatpush.msra.mxu0 %v502
    %583 = vmatpush.msra.mxu0 %v499
    %584 = vmatmul.f32.gmra.mxu0 %v246
    %v585 = vpop.f32.mrf.mxu0
    %v586 = vadd.f32 0.0, %v585
    %587 = vmatmul.f32.gmra.mxu0 %v249
    %v588 = vpop.f32.mrf.mxu0
    %v589 = vadd.f32 0.0, %v588
    %590 = vmatmul.f32.gmra.mxu0 %v252
    %v591 = vpop.f32.mrf.mxu0
    %v592 = vadd.f32 0.0, %v591
    %593 = vmatmul.f32.gmra.mxu0 %v255
    %v594 = vpop.f32.mrf.mxu0
    %v595 = vadd.f32 0.0, %v594
    %596 = vdwg.mxu0
    %v597 = vadd.f32 %v528, %v586
    %v598 = vadd.f32 %v531, %v589
    %v599 = vadd.f32 %v534, %v592
    %v600 = vadd.f32 %v537, %v595
    %v601 = vld [vmem:[%s6 + $0x2] sm:$0x1]
    %v602 = vld [vmem:[%s6 + $0x3] sm:$0x1]
    %v603 = vadd.f32 %v597, %v598
    %v604 = vadd.f32 %v603, %v599
    %v605 = vadd.f32 %v604, %v600
    %v606 = vrot.slane %v605, 4
    %v607 = vadd.f32 %v605, %v606
    %v608 = vrot.slane %v607, 2
    %v609 = vadd.f32 %v607, %v608
    %v610 = vrot.slane %v609, 1
    %v611 = vadd.f32 %v609, %v610
    %v612 = vmul.f32 %v597, %v597
    %v613 = vmul.f32 %v598, %v598
    %v614 = vmul.f32 %v599, %v599
    %v615 = vmul.f32 %v600, %v600
    %v616 = vadd.f32 %v612, %v613
    %v617 = vadd.f32 %v616, %v614
    %v618 = vadd.f32 %v617, %v615
    %v619 = vrot.slane %v618, 4
    %v620 = vadd.f32 %v618, %v619
    %v621 = vrot.slane %v620, 2
    %v622 = vadd.f32 %v620, %v621
    %v623 = vrot.slane %v622, 1
    %v624 = vadd.f32 %v622, %v623
    %625 = vmatpush.msra.mxu0 %v82
    %626 = vmatpush.msra.mxu0 %v81
    %627 = vmatpush.msra.mxu0 %v80
    %628 = vmatpush.msra.mxu0 %v79
    %629 = vmatpush.msra.mxu0 %v78
    %630 = vmatpush.msra.mxu0 %v77
    %631 = vmatpush.msra.mxu0 %v76
    %632 = vmatpush.msra.mxu0 %v75
    %633 = vmatpush.msra.mxu0 %v74
    %634 = vmatpush.msra.mxu0 %v73
    %635 = vmatpush.msra.mxu0 %v72
    %636 = vmatpush.msra.mxu0 %v71
    %637 = vmatpush.msra.mxu0 %v70
    %638 = vmatpush.msra.mxu0 %v69
    %639 = vmatpush.msra.mxu0 %v68
    %640 = vmatpush.msra.mxu0 %v67
    %641 = vmatmul.f32.gmra.mxu0 %v611
    %v642 = vpop.f32.mrf.mxu0
    %v643 = vadd.f32 0.0, %v642
    %644 = vdwg.mxu0
    %v645 = vmul.f32 %v643, 0.001953125
    %646 = vmatpush.msra.mxu0 %v82
    %647 = vmatpush.msra.mxu0 %v81
    %648 = vmatpush.msra.mxu0 %v80
    %649 = vmatpush.msra.mxu0 %v79
    %650 = vmatpush.msra.mxu0 %v78
    %651 = vmatpush.msra.mxu0 %v77
    %652 = vmatpush.msra.mxu0 %v76
    %653 = vmatpush.msra.mxu0 %v75
    %654 = vmatpush.msra.mxu0 %v74
    %655 = vmatpush.msra.mxu0 %v73
    %656 = vmatpush.msra.mxu0 %v72
    %657 = vmatpush.msra.mxu0 %v71
    %658 = vmatpush.msra.mxu0 %v70
    %659 = vmatpush.msra.mxu0 %v69
    %660 = vmatpush.msra.mxu0 %v68
    %661 = vmatpush.msra.mxu0 %v67
    %662 = vmatmul.f32.gmra.mxu0 %v624
    %v663 = vpop.f32.mrf.mxu0
    %v664 = vadd.f32 0.0, %v663
    %665 = vdwg.mxu0
    %v666 = vmul.f32 %v664, 0.001953125
    %v667 = vmul.f32 %v645, %v645
    %v668 = vsub.f32 %v666, %v667
    %v669 = vadd.f32 %v668, 1e-05
    %v670 = vrsqrt.pop %v669
    %v671 = vmul.f32 %v670, %v669
    %v672 = vmul.f32 %v671, %v670
    %v673 = vmul.f32 0.5, %v672
    %v674 = vsub.f32 1.5, %v673
    %v675 = vmul.f32 %v670, %v674
    %vm676 = vweird.f32 %v669
    %vm677 = vweird.f32 %v670
    %vm678 = vmor %vm676, %vm677
    %v679 = vsel %vm678, %v670, %v675
    %v680 = vmul.f32 %v601, %v679
    %v681 = vmul.f32 %v645, %v680
    %v682 = vsub.f32 %v602, %v681
    %v684 = vsel %vm372, %v680, 0
    %686 = vmatpush.msra.mxu0 0.0
    %687 = vmatpush.msra.mxu0 0.0
    %688 = vmatpush.msra.mxu0 0.0
    %689 = vmatpush.msra.mxu0 0.0
    %690 = vmatpush.msra.mxu0 0.0
    %691 = vmatpush.msra.mxu0 0.0
    %692 = vmatpush.msra.mxu0 0.0
    %693 = vmatpush.msra.mxu0 0.0
    %694 = vmatpush.msra.mxu0 0.0
    %695 = vmatpush.msra.mxu0 0.0
    %696 = vmatpush.msra.mxu0 0.0
    %697 = vmatpush.msra.mxu0 0.0
    %698 = vmatpush.msra.mxu0 0.0
    %699 = vmatpush.msra.mxu0 0.0
    %700 = vmatpush.msra.mxu0 0.0
    %701 = vmatpush.msra.mxu0 %v83
    %702 = vmatmul.f32.gmra.mxu0 %v684
    %v703 = vpop.f32.mrf.mxu0
    %v704 = vadd.f32 0.0, %v703
    %705 = vdwg.mxu0
    %v707 = vsel %vm372, %v682, 0
    %709 = vmatpush.msra.mxu0 0.0
    %710 = vmatpush.msra.mxu0 0.0
    %711 = vmatpush.msra.mxu0 0.0
    %712 = vmatpush.msra.mxu0 0.0
    %713 = vmatpush.msra.mxu0 0.0
    %714 = vmatpush.msra.mxu0 0.0
    %715 = vmatpush.msra.mxu0 0.0
    %716 = vmatpush.msra.mxu0 0.0
    %717 = vmatpush.msra.mxu0 0.0
    %718 = vmatpush.msra.mxu0 0.0
    %719 = vmatpush.msra.mxu0 0.0
    %720 = vmatpush.msra.mxu0 0.0
    %721 = vmatpush.msra.mxu0 0.0
    %722 = vmatpush.msra.mxu0 0.0
    %723 = vmatpush.msra.mxu0 0.0
    %724 = vmatpush.msra.mxu0 %v83
    %725 = vmatmul.f32.gmra.mxu0 %v707
    %v726 = vpop.f32.mrf.mxu0
    %v727 = vadd.f32 0.0, %v726
    %728 = vdwg.mxu0
    %v729 = vperm.slane %v704, 0
    %v730 = vmul.f32 %v597, %v729
    %v731 = vmul.f32 %v598, %v729
    %v732 = vmul.f32 %v599, %v729
    %v733 = vmul.f32 %v600, %v729
    %v734 = vperm.slane %v727, 0
    %v735 = vadd.f32 %v730, %v734
    %v736 = vadd.f32 %v731, %v734
    %v737 = vadd.f32 %v732, %v734
    %v738 = vadd.f32 %v733, %v734
    %v739 = vld [vmem:[%s6 + $0x4] sm:$0x1]
    %v740 = vld [vmem:[%s6 + $0x5] sm:$0x1]
    %v741 = vadd.f32 %v234, %v237
    %v742 = vadd.f32 %v741, %v240
    %v743 = vadd.f32 %v742, %v243
    %v744 = vrot.slane %v743, 4
    %v745 = vadd.f32 %v743, %v744
    %v746 = vrot.slane %v745, 2
    %v747 = vadd.f32 %v745, %v746
    %v748 = vrot.slane %v747, 1
    %v749 = vadd.f32 %v747, %v748
    %v750 = vmul.f32 %v234, %v234
    %v751 = vmul.f32 %v237, %v237
    %v752 = vmul.f32 %v240, %v240
    %v753 = vmul.f32 %v243, %v243
    %v754 = vadd.f32 %v750, %v751
    %v755 = vadd.f32 %v754, %v752
    %v756 = vadd.f32 %v755, %v753
    %v757 = vrot.slane %v756, 4
    %v758 = vadd.f32 %v756, %v757
    %v759 = vrot.slane %v758, 2
    %v760 = vadd.f32 %v758, %v759
    %v761 = vrot.slane %v760, 1
    %v762 = vadd.f32 %v760, %v761
    %763 = vmatpush.msra.mxu0 %v82
    %764 = vmatpush.msra.mxu0 %v81
    %765 = vmatpush.msra.mxu0 %v80
    %766 = vmatpush.msra.mxu0 %v79
    %767 = vmatpush.msra.mxu0 %v78
    %768 = vmatpush.msra.mxu0 %v77
    %769 = vmatpush.msra.mxu0 %v76
    %770 = vmatpush.msra.mxu0 %v75
    %771 = vmatpush.msra.mxu0 %v74
    %772 = vmatpush.msra.mxu0 %v73
    %773 = vmatpush.msra.mxu0 %v72
    %774 = vmatpush.msra.mxu0 %v71
    %775 = vmatpush.msra.mxu0 %v70
    %776 = vmatpush.msra.mxu0 %v69
    %777 = vmatpush.msra.mxu0 %v68
    %778 = vmatpush.msra.mxu0 %v67
    %779 = vmatmul.f32.gmra.mxu0 %v749
    %v780 = vpop.f32.mrf.mxu0
    %v781 = vadd.f32 0.0, %v780
    %782 = vdwg.mxu0
    %v783 = vmul.f32 %v781, 0.001953125
    %784 = vmatpush.msra.mxu0 %v82
    %785 = vmatpush.msra.mxu0 %v81
    %786 = vmatpush.msra.mxu0 %v80
    %787 = vmatpush.msra.mxu0 %v79
    %788 = vmatpush.msra.mxu0 %v78
    %789 = vmatpush.msra.mxu0 %v77
    %790 = vmatpush.msra.mxu0 %v76
    %791 = vmatpush.msra.mxu0 %v75
    %792 = vmatpush.msra.mxu0 %v74
    %793 = vmatpush.msra.mxu0 %v73
    %794 = vmatpush.msra.mxu0 %v72
    %795 = vmatpush.msra.mxu0 %v71
    %796 = vmatpush.msra.mxu0 %v70
    %797 = vmatpush.msra.mxu0 %v69
    %798 = vmatpush.msra.mxu0 %v68
    %799 = vmatpush.msra.mxu0 %v67
    %800 = vmatmul.f32.gmra.mxu0 %v762
    %v801 = vpop.f32.mrf.mxu0
    %v802 = vadd.f32 0.0, %v801
    %803 = vdwg.mxu0
    %v804 = vmul.f32 %v802, 0.001953125
    %v805 = vmul.f32 %v783, %v783
    %v806 = vsub.f32 %v804, %v805
    %v807 = vadd.f32 %v806, 1e-05
    %v808 = vrsqrt.pop %v807
    %v809 = vmul.f32 %v808, %v807
    %v810 = vmul.f32 %v809, %v808
    %v811 = vmul.f32 0.5, %v810
    %v812 = vsub.f32 1.5, %v811
    %v813 = vmul.f32 %v808, %v812
    %vm814 = vweird.f32 %v807
    %vm815 = vweird.f32 %v808
    %vm816 = vmor %vm814, %vm815
    %v817 = vsel %vm816, %v808, %v813
    %v818 = vmul.f32 %v739, %v817
    %v819 = vmul.f32 %v783, %v818
    %v820 = vsub.f32 %v740, %v819
    %v822 = vsel %vm372, %v818, 0
    %824 = vmatpush.msra.mxu0 0.0
    %825 = vmatpush.msra.mxu0 0.0
    %826 = vmatpush.msra.mxu0 0.0
    %827 = vmatpush.msra.mxu0 0.0
    %828 = vmatpush.msra.mxu0 0.0
    %829 = vmatpush.msra.mxu0 0.0
    %830 = vmatpush.msra.mxu0 0.0
    %831 = vmatpush.msra.mxu0 0.0
    %832 = vmatpush.msra.mxu0 0.0
    %833 = vmatpush.msra.mxu0 0.0
    %834 = vmatpush.msra.mxu0 0.0
    %835 = vmatpush.msra.mxu0 0.0
    %836 = vmatpush.msra.mxu0 0.0
    %837 = vmatpush.msra.mxu0 0.0
    %838 = vmatpush.msra.mxu0 0.0
    %839 = vmatpush.msra.mxu0 %v83
    %840 = vmatmul.f32.gmra.mxu0 %v822
    %v841 = vpop.f32.mrf.mxu0
    %v842 = vadd.f32 0.0, %v841
    %843 = vdwg.mxu0
    %v845 = vsel %vm372, %v820, 0
    %847 = vmatpush.msra.mxu0 0.0
    %848 = vmatpush.msra.mxu0 0.0
    %849 = vmatpush.msra.mxu0 0.0
    %850 = vmatpush.msra.mxu0 0.0
    %851 = vmatpush.msra.mxu0 0.0
    %852 = vmatpush.msra.mxu0 0.0
    %853 = vmatpush.msra.mxu0 0.0
    %854 = vmatpush.msra.mxu0 0.0
    %855 = vmatpush.msra.mxu0 0.0
    %856 = vmatpush.msra.mxu0 0.0
    %857 = vmatpush.msra.mxu0 0.0
    %858 = vmatpush.msra.mxu0 0.0
    %859 = vmatpush.msra.mxu0 0.0
    %860 = vmatpush.msra.mxu0 0.0
    %861 = vmatpush.msra.mxu0 0.0
    %862 = vmatpush.msra.mxu0 %v83
    %863 = vmatmul.f32.gmra.mxu0 %v845
    %v864 = vpop.f32.mrf.mxu0
    %v865 = vadd.f32 0.0, %v864
    %866 = vdwg.mxu0
    %v867 = vperm.slane %v842, 0
    %v868 = vmul.f32 %v234, %v867
    %v869 = vmul.f32 %v237, %v867
    %v870 = vmul.f32 %v240, %v867
    %v871 = vmul.f32 %v243, %v867
    %v872 = vperm.slane %v865, 0
    %v873 = vadd.f32 %v868, %v872
    %v874 = vadd.f32 %v869, %v872
    %v875 = vadd.f32 %v870, %v872
    %v876 = vadd.f32 %v871, %v872
    %v877 = vadd.f32 %v735, %v873
    %v878 = vadd.f32 %v736, %v874
    %v879 = vadd.f32 %v737, %v875
    %v880 = vadd.f32 %v738, %v876
    %v881 = vmax.f32 %v877, 0.0
    %v882 = vmax.f32 %v878, 0.0
    %v883 = vmax.f32 %v879, 0.0
    %v884 = vmax.f32 %v880, 0.0
    %885 = vst [vmem:[#allocation7] sm:$0xff] %v881
    %886 = vst [vmem:[#allocation7 + $0x8] sm:$0xff] %v882
    %887 = vst [vmem:[#allocation7 + $0x10] sm:$0xff] %v883
    %888 = vst [vmem:[#allocation7 + $0x18] sm:$0xff] %v884
    // Predicated region
    $region38: #{tpu_custom_call.1} parent=1 // pred_check
      _
    $region39: #{tpu_custom_call.1} parent=1 // pred_check_branch
      %890 = sbr.rel (0) target = $region41
    $region40: #{tpu_custom_call.1} parent=1 // pred_region
      %892 = vsyncadd [#allocation4], 0
      %s893 = sshll.u32 [#allocation7], 4
      %s894 = int_to_ptr.vmem [resolvable:$true] %s893
      %s895 = sshll.u32 %s7, 4
      %s896 = int_to_ptr.hbm [resolvable:$true] %s895
      %901 = dma.vmem_to_hbm [thread:$0]  %s894, 512, %s896, [#allocation4], 128, 128, 8
    $region41: #{tpu_custom_call.1} parent=1 // pred_fallthru
      _
    // Predicated region
    $region42: #{tpu_custom_call.1} parent=1 // pred_check
      _
    $region43: #{tpu_custom_call.1} parent=1 // pred_check_branch
      %903 = sbr.rel (0) target = $region45
    $region44: #{tpu_custom_call.1} parent=1 // pred_region
      %905 = dma.done [#allocation4], 512
    $region45: #{tpu_custom_call.1} parent=1 // pred_fallthru
      _
    %906 = vsyncpa [#allocation3], 1
    %907 = vsyncpa [#allocation6], 1
    %908 = vsyncpa [#allocation4], 1

</llo_original>
